<compile_context>
chip_gen: v7x
topology: tpu7x:2x2x1
jax: 0.10.0
libtpu: 0.0.40
codegen_flags: <defaults>
</compile_context>

<pallas_src>
import jax
import jax.numpy as jnp
from jax.experimental import pallas as pl
from jax.experimental.pallas import tpu as pltpu


def _pick_batch_block(n: int, max_blk: int = 8) -> int:
    """Largest divisor of n not exceeding max_blk (samples processed per grid step)."""
    for b in range(min(n, max_blk), 0, -1):
        if n % b == 0:
            return b
    return 1


def causal_layer_kernel(x_ref, w_ref, o_ref):
    # x_ref: (B, C_in, L)      NCL block, L on the lane axis
    # w_ref: (2*C_out, C_in)   rows [:C_out] = tap on x[t], rows [C_out:] = tap on x[t-1]
    # o_ref: (B, C_out, L)     column L-1 is invalid (trimmed by the wrapper)
    w = w_ref[...]
    n_b, c_out, L = o_ref.shape

    for b in range(n_b):  # static unroll over the per-step sample block
        x = x_ref[b]                                               # (C_in, L)

        # One fused MXU matmul covers both conv taps.
        y = jnp.dot(w, x, preferred_element_type=jnp.float32)      # (2*C_out, L)
        y_cur = y[:c_out, :]          # w[:, :, 1] @ x[t]
        y_prev = y[c_out:, :]         # w[:, :, 0] @ x[t]   (needs a 1-step causal shift)

        # Causal shift on the matmul output: XLU lane roll + zero the wrapped column.
        y_prev_sh = pltpu.roll(y_prev, shift=1, axis=1)            # [:, t] <- y_prev[:, t-1]
        t_idx = jax.lax.broadcasted_iota(jnp.int32, (c_out, L), 1)
        conv = y_cur + jnp.where(t_idx >= 1, y_prev_sh, 0.0)

        a = jnp.maximum(conv, 0.0)                                 # ReLU
        # TODO(synk): training-mode Dropout(p=0.5) is stochastic; modeled here as
        #             eval-mode identity to keep the kernel deterministic.

        # MaxPool1d(kernel=2, stride=1): m[:, t] = max(a[:, t], a[:, t+1]).
        # roll(shift=L-1) == roll(shift=-1); the wrapped last column is trimmed later.
        m = jnp.maximum(a, pltpu.roll(a, shift=L - 1, axis=1))

        # Final ReLU of the module is redundant: m is a max of ReLU outputs (>= 0).
        o_ref[b] = m


def causal_layer_forward(x_ncl, weight):
    """x_ncl: (N, C_in, L) float; weight: (C_out, C_in, 2) (torch Conv1d layout).

    Returns (N, C_out, L-1), matching the torch module's eval-dropout forward.
    """
    N, C_in, L = x_ncl.shape
    C_out = weight.shape[0]

    x = x_ncl.astype(jnp.float32)
    # Fuse the two taps along the output-channel axis: one weight DMA, one matmul.
    w_cat = jnp.concatenate(
        [weight[:, :, 1], weight[:, :, 0]], axis=0).astype(jnp.float32)   # (2*C_out, C_in)

    b_blk = _pick_batch_block(N)

    out_full = pl.pallas_call(
        causal_layer_kernel,
        out_shape=jax.ShapeDtypeStruct((N, C_out, L), jnp.float32),
        grid=(N // b_blk,),
        in_specs=[
            pl.BlockSpec((b_blk, C_in, L), lambda i: (i, 0, 0)),
            pl.BlockSpec((2 * C_out, C_in), lambda i: (0, 0)),
        ],
        out_specs=pl.BlockSpec((b_blk, C_out, L), lambda i: (i, 0, 0)),
        compiler_params=pltpu.CompilerParams(
            dimension_semantics=("parallel",)),
    )(x, w_cat)

    # Kernel emits a full-length-L lane-dense block (unmasked stores); trim the
    # invalid last pool position here (cheap XLA slice).
    return out_full[:, :, : L - 1]


def _reference_forward(x_ncl, weight):
    """Pure-JAX reference mirroring the torch forward (dropout in eval mode)."""
    y = jax.lax.conv_general_dilated(
        x_ncl, weight, window_strides=(1,), padding=[(1, 1)],
        dimension_numbers=("NCH", "OIH", "NCH"))
    y = y[:, :, :-1]                               # RemoveTrail(1)
    a = jnp.maximum(y, 0.0)                        # ReLU
    m = jnp.maximum(a[:, :, :-1], a[:, :, 1:])     # MaxPool1d(2, stride=1)
    return jnp.maximum(m, 0.0)                     # ReLU


if __name__ == "__main__":
    key = jax.random.PRNGKey(0)
    kx, kw = jax.random.split(key)

    N, C_in, C_out, L = 2, 4, 8, 16
    x = jax.random.normal(kx, (N, C_in, L), dtype=jnp.float32)
    # Conv1d weight init: normal(mean=0, std=0.01), shape (C_out, C_in, kernel=2)
    weight = 0.01 * jax.random.normal(kw, (C_out, C_in, 2), dtype=jnp.float32)

    out = causal_layer_forward(x, weight)
    out = jax.block_until_ready(out)

    ref = _reference_forward(x, weight)
    assert out.shape == (N, C_out, L - 1), out.shape
    assert jnp.allclose(out, ref, atol=1e-5, rtol=1e-5), float(
        jnp.max(jnp.abs(out - ref)))

    print("KERNEL_OK")
</pallas_src>

<mosaic_0001>
module attributes {stable_mosaic.version = 11 : i64} {
  func.func @causal_layer_kernel(%arg0: i32, %arg1: memref<2x4x16xf32, #tpu.memory_space<vmem>>, %arg2: memref<16x4xf32, #tpu.memory_space<vmem>>, %arg3: memref<2x8x16xf32, #tpu.memory_space<vmem>>) attributes {dimension_semantics = [#tpu.dimension_semantics<parallel>], iteration_bounds = array<i64: 1>, scalar_prefetch = 0 : i64, scratch_operands = 0 : i64, tpu.core_type = #tpu.core_type<tc>, window_params = [{transform_indices = @transform_0, window_bounds = array<i64: 2, 4, 16>}, {pipeline_mode = #tpu.pipeline_mode<synchronous>, transform_indices = @transform_1, window_bounds = array<i64: 16, 4>}, {transform_indices = @transform_2, window_bounds = array<i64: 2, 8, 16>}]} {
    %c0 = arith.constant 0 : index
    %c0_0 = arith.constant 0 : index
    %0 = vector.load %arg2[%c0, %c0_0] : memref<16x4xf32, #tpu.memory_space<vmem>>, vector<16x4xf32>
    %c0_1 = arith.constant 0 : index
    %c0_2 = arith.constant 0 : index
    %c0_3 = arith.constant 0 : index
    %1 = vector.load %arg1[%c0_1, %c0_2, %c0_3] : memref<2x4x16xf32, #tpu.memory_space<vmem>>, vector<1x4x16xf32>
    %2 = vector.shape_cast %1 : vector<1x4x16xf32> to vector<4x16xf32>
    %cst = arith.constant dense<0.000000e+00> : vector<16x16xf32>
    %3 = tpu.matmul %0, %2, %cst {dimension_numbers = #tpu.dot_dimension_numbers<[1], [0], [0], [1], [0, 0, 1, 1], [], []>} : vector<16x4xf32>, vector<4x16xf32>, vector<16x16xf32> -> vector<16x16xf32>
    %4 = vector.extract_strided_slice %3 {offsets = [0, 0], sizes = [8, 16], strides = [1, 1]} : vector<16x16xf32> to vector<8x16xf32>
    %5 = vector.extract_strided_slice %3 {offsets = [8, 0], sizes = [8, 16], strides = [1, 1]} : vector<16x16xf32> to vector<8x16xf32>
    %c1_i32 = arith.constant 1 : i32
    %6 = tpu.dynamic_rotate %5 by %c1_i32 dim 1 : vector<8x16xf32>, i32 -> vector<8x16xf32>
    %7 = tpu.iota {dimensions = array<i32: 1>} : vector<8x16xi32>
    %c1_i32_4 = arith.constant 1 : i32
    %8 = vector.broadcast %c1_i32_4 : i32 to vector<8x16xi32>
    %9 = arith.cmpi sge, %7, %8 : vector<8x16xi32>
    %cst_5 = arith.constant 0.000000e+00 : f32
    %10 = vector.broadcast %cst_5 : f32 to vector<8x16xf32>
    %11 = arith.select %9, %6, %10 : vector<8x16xi1>, vector<8x16xf32>
    %12 = arith.addf %4, %11 : vector<8x16xf32>
    %cst_6 = arith.constant 0.000000e+00 : f32
    %13 = vector.broadcast %cst_6 : f32 to vector<8x16xf32>
    %14 = arith.maximumf %12, %13 : vector<8x16xf32>
    %c15_i32 = arith.constant 15 : i32
    %15 = tpu.dynamic_rotate %14 by %c15_i32 dim 1 : vector<8x16xf32>, i32 -> vector<8x16xf32>
    %16 = arith.maximumf %14, %15 : vector<8x16xf32>
    %c0_7 = arith.constant 0 : index
    %c0_8 = arith.constant 0 : index
    %c0_9 = arith.constant 0 : index
    %17 = vector.load %arg3[%c0_7, %c0_8, %c0_9] : memref<2x8x16xf32, #tpu.memory_space<vmem>>, vector<1x8x16xf32>
    %18 = vector.shape_cast %17 : vector<1x8x16xf32> to vector<8x16xf32>
    %19 = vector.shape_cast %16 : vector<8x16xf32> to vector<1x8x16xf32>
    tpu.vector_store %arg3[%c0_7, %c0_8, %c0_9], %19 {strides = array<i32>} : memref<2x8x16xf32, #tpu.memory_space<vmem>>, vector<1x8x16xf32>,
    %c1 = arith.constant 1 : index
    %c0_10 = arith.constant 0 : index
    %c0_11 = arith.constant 0 : index
    %20 = vector.load %arg1[%c1, %c0_10, %c0_11] : memref<2x4x16xf32, #tpu.memory_space<vmem>>, vector<1x4x16xf32>
    %21 = vector.shape_cast %20 : vector<1x4x16xf32> to vector<4x16xf32>
    %cst_12 = arith.constant dense<0.000000e+00> : vector<16x16xf32>
    %22 = tpu.matmul %0, %21, %cst_12 {dimension_numbers = #tpu.dot_dimension_numbers<[1], [0], [0], [1], [0, 0, 1, 1], [], []>} : vector<16x4xf32>, vector<4x16xf32>, vector<16x16xf32> -> vector<16x16xf32>
    %23 = vector.extract_strided_slice %22 {offsets = [0, 0], sizes = [8, 16], strides = [1, 1]} : vector<16x16xf32> to vector<8x16xf32>
    %24 = vector.extract_strided_slice %22 {offsets = [8, 0], sizes = [8, 16], strides = [1, 1]} : vector<16x16xf32> to vector<8x16xf32>
    %c1_i32_13 = arith.constant 1 : i32
    %25 = tpu.dynamic_rotate %24 by %c1_i32_13 dim 1 : vector<8x16xf32>, i32 -> vector<8x16xf32>
    %26 = tpu.iota {dimensions = array<i32: 1>} : vector<8x16xi32>
    %c1_i32_14 = arith.constant 1 : i32
    %27 = vector.broadcast %c1_i32_14 : i32 to vector<8x16xi32>
    %28 = arith.cmpi sge, %26, %27 : vector<8x16xi32>
    %cst_15 = arith.constant 0.000000e+00 : f32
    %29 = vector.broadcast %cst_15 : f32 to vector<8x16xf32>
    %30 = arith.select %28, %25, %29 : vector<8x16xi1>, vector<8x16xf32>
    %31 = arith.addf %23, %30 : vector<8x16xf32>
    %cst_16 = arith.constant 0.000000e+00 : f32
    %32 = vector.broadcast %cst_16 : f32 to vector<8x16xf32>
    %33 = arith.maximumf %31, %32 : vector<8x16xf32>
    %c15_i32_17 = arith.constant 15 : i32
    %34 = tpu.dynamic_rotate %33 by %c15_i32_17 dim 1 : vector<8x16xf32>, i32 -> vector<8x16xf32>
    %35 = arith.maximumf %33, %34 : vector<8x16xf32>
    %c1_18 = arith.constant 1 : index
    %c0_19 = arith.constant 0 : index
    %c0_20 = arith.constant 0 : index
    %36 = vector.load %arg3[%c1_18, %c0_19, %c0_20] : memref<2x8x16xf32, #tpu.memory_space<vmem>>, vector<1x8x16xf32>
    %37 = vector.shape_cast %36 : vector<1x8x16xf32> to vector<8x16xf32>
    %38 = vector.shape_cast %35 : vector<8x16xf32> to vector<1x8x16xf32>
    tpu.vector_store %arg3[%c1_18, %c0_19, %c0_20], %38 {strides = array<i32>} : memref<2x8x16xf32, #tpu.memory_space<vmem>>, vector<1x8x16xf32>,
    return
  }
  func.func @transform_0(%arg0: i32) -> (i32, i32, i32) {
    %c0_i32 = arith.constant 0 : i32
    %c0_i32_0 = arith.constant 0 : i32
    %c0_i32_1 = arith.constant 0 : i32
    return %arg0, %c0_i32, %c0_i32_0 : i32, i32, i32
  }
  func.func @transform_1(%arg0: i32) -> (i32, i32) {
    %c0_i32 = arith.constant 0 : i32
    %c0_i32_0 = arith.constant 0 : i32
    %c0_i32_1 = arith.constant 0 : i32
    return %c0_i32, %c0_i32_0 : i32, i32
  }
  func.func @transform_2(%arg0: i32) -> (i32, i32, i32) {
    %c0_i32 = arith.constant 0 : i32
    %c0_i32_0 = arith.constant 0 : i32
    %c0_i32_1 = arith.constant 0 : i32
    return %arg0, %c0_i32, %c0_i32_0 : i32, i32, i32
  }
}

</mosaic_0001>

<llo_original>
// kernel: tpu_custom_call.1
$region0: #{tpu_custom_call.1}
  #allocation0 [shape = 'u32[]', space=smem, size = 0x4, offset = 0x4, fixed_abs, tag = 'smem constant byte address 0x4 - core index']
  #allocation1 [shape = 'u32[144,128]{1,0:T(1,128)}', space=vmem, size = 0x12000, scoped, tag = 'internal scratch']
  %s0 = inlined_call_operand.vmem [shape: f32[2,4,16], index: 0, kind: input, shape index: {}]
  %s1 = inlined_call_operand.vmem [shape: f32[16,4], index: 1, kind: input, shape index: {}]
  %s2 = inlined_call_operand.hbm [shape: f32[2,8,16], index: 2, kind: output, shape index: {}]
  %s3 = sld [smem:[#allocation0]]
  $region18: #{tpu_custom_call.1} parent=0
    _
  %s5 = ssub.s32 1, %s3
  %s6 = scalar_select 0, %s5, %s3
  $region1: #{tpu_custom_call.1} parent=0
    #allocation2 [shape = 'u8[8192]{0}', space=vmem, size = 0x2000, scoped, tag = 'output window, operand 0, single buffered']
    #allocation3 [shape = 's32[1]{0}', space=sflag, size = 0x4, scoped, tag = 'scoped memory for tpu_custom_call.1']
    %7 = vsyncpa [#allocation3], 0
    // Predicated region
    $region2: #{tpu_custom_call.1} parent=1 // pred_check
      _
    $region3: #{tpu_custom_call.1} parent=1 // pred_check_branch
      %9 = sbr.rel (0) target = $region5
    $region4: #{tpu_custom_call.1} parent=1 // pred_region
      _
    $region5: #{tpu_custom_call.1} parent=1 // pred_fallthru
      _
    // Predicated region
    $region6: #{tpu_custom_call.1} parent=1 // pred_check
      _
    $region7: #{tpu_custom_call.1} parent=1 // pred_check_branch
      %11 = sbr.rel (0) target = $region9
    $region8: #{tpu_custom_call.1} parent=1 // pred_region
      _
    $region9: #{tpu_custom_call.1} parent=1 // pred_fallthru
      _
    %v12 = vld [vmem:[%s1] sm:$0xff]
    %v13 = vld [vmem:[%s1 + $0x8] sm:$0xff]
    %v14 = vld [vmem:[%s0] sm:$0xf]
    %vm15 = vcmask 31744
    %v17 = vsel %vm15, %v12, 0
    %v20 = vsel %vm15, %v13, 0
    %vm22 = vcmask 1043456
    %v24 = vsel %vm22, %v14, 0
    %26 = vmatprep.subr.mxu0 0.0
    %27 = vmatpush1.msra.mxu0 %v24
    %28 = vmatprep.subr.mxu0 0.0
    %29 = vmatpush1.msra.mxu0 0.0
    %30 = vmatprep.subr.mxu0 0.0
    %31 = vmatpush1.msra.mxu0 0.0
    %32 = vmatprep.subr.mxu0 0.0
    %33 = vmatpush1.msra.mxu0 0.0
    %34 = vmatprep.subr.mxu0 0.0
    %35 = vmatpush1.msra.mxu0 0.0
    %36 = vmatprep.subr.mxu0 0.0
    %37 = vmatpush1.msra.mxu0 0.0
    %38 = vmatprep.subr.mxu0 0.0
    %39 = vmatpush1.msra.mxu0 0.0
    %40 = vmatprep.subr.mxu0 0.0
    %41 = vmatpush1.msra.mxu0 0.0
    %42 = vmatprep.subr.mxu0 0.0
    %43 = vmatpush1.msra.mxu0 0.0
    %44 = vmatprep.subr.mxu0 0.0
    %45 = vmatpush1.msra.mxu0 0.0
    %46 = vmatprep.subr.mxu0 0.0
    %47 = vmatpush1.msra.mxu0 0.0
    %48 = vmatprep.subr.mxu0 0.0
    %49 = vmatpush1.msra.mxu0 0.0
    %50 = vmatprep.subr.mxu0 0.0
    %51 = vmatpush1.msra.mxu0 0.0
    %52 = vmatprep.subr.mxu0 0.0
    %53 = vmatpush1.msra.mxu0 0.0
    %54 = vmatprep.subr.mxu0 0.0
    %55 = vmatpush1.msra.mxu0 0.0
    %56 = vmatprep.subr.mxu0 0.0
    %57 = vmatpush1.msra.mxu0 0.0
    %58 = vmatprep.subr.mxu0 0.0
    %59 = vmatpush1.msra.mxu0 0.0
    %60 = vmatprep.subr.mxu0 0.0
    %61 = vmatpush1.msra.mxu0 0.0
    %62 = vmatprep.subr.mxu0 0.0
    %63 = vmatpush1.msra.mxu0 0.0
    %64 = vmatprep.subr.mxu0 0.0
    %65 = vmatpush1.msra.mxu0 0.0
    %66 = vmatprep.subr.mxu0 0.0
    %67 = vmatpush1.msra.mxu0 0.0
    %68 = vmatprep.subr.mxu0 0.0
    %69 = vmatpush1.msra.mxu0 0.0
    %70 = vmatprep.subr.mxu0 0.0
    %71 = vmatpush1.msra.mxu0 0.0
    %72 = vmatprep.subr.mxu0 0.0
    %73 = vmatpush1.msra.mxu0 0.0
    %74 = vmatprep.subr.mxu0 0.0
    %75 = vmatpush1.msra.mxu0 0.0
    %76 = vmatprep.subr.mxu0 0.0
    %77 = vmatpush1.msra.mxu0 0.0
    %78 = vmatprep.subr.mxu0 0.0
    %79 = vmatpush1.msra.mxu0 0.0
    %80 = vmatprep.subr.mxu0 0.0
    %81 = vmatpush1.msra.mxu0 0.0
    %82 = vmatprep.subr.mxu0 0.0
    %83 = vmatpush1.msra.mxu0 0.0
    %84 = vmatprep.subr.mxu0 0.0
    %85 = vmatpush1.msra.mxu0 0.0
    %86 = vmatprep.subr.mxu0 0.0
    %87 = vmatpush1.msra.mxu0 0.0
    %88 = vmatprep.subr.mxu0 0.0
    %89 = vmatpush1.msra.mxu0 0.0
    %90 = vmatprep.mubr.f32.mxu0 0.0
    %91 = vmatmul.mubr.f32.gmra.mrb[0].mxu0 %v17
    %v92 = vpop.f32.mrb[0].mxu0
    %v93 = vadd.f32 0.0, %v92
    %v94 = vpop.f32.mrb[0].mxu0
    %95 = vmatprep.mubr.f32.mxu0 0.0
    %96 = vmatmul.mubr.f32.gmra.mrb[0].mxu0 %v20
    %v97 = vpop.f32.mrb[0].mxu0
    %v98 = vadd.f32 0.0, %v97
    %v99 = vpop.f32.mrb[0].mxu0
    %100 = vdwg.mxu0
    %vm101 = vcmask 1047680
    %102 = vrot.lane.b32.xlu0 %v98, 16
    %v103 = vpop.permute.xlu0 %102
    %v104 = vsel %vm101, %v103, %v98
    %105 = vrot.lane.b32.xlu0 %v104, 16
    %v106 = vpop.permute.xlu0 %105
    %v107 = vsel %vm101, %v106, %v98
    %v108 = vlaneseq
    %v109 = vand.u32 %v108, 127
    %vm110 = vcmp.ge.s32.totalorder %v109, 1
    %112 = vrot.lane.b32.xlu0 %v107, 113
    %v113 = vpop.permute.xlu0 %112
    %v115 = vsel %vm110, %v113, 0.0
    %v116 = vadd.f32 %v93, %v115
    %v117 = vmax.f32 %v116, 0.0
    %118 = vrot.lane.b32.xlu0 %v117, 16
    %v119 = vpop.permute.xlu0 %118
    %v120 = vsel %vm101, %v119, %v117
    %121 = vrot.lane.b32.xlu0 %v120, 16
    %v122 = vpop.permute.xlu0 %121
    %v123 = vsel %vm101, %v122, %v117
    %125 = vrot.lane.b32.xlu0 %v123, 127
    %v126 = vpop.permute.xlu0 %125
    %v128 = vmax.f32 %v117, %v126
    %vm129 = vcmask 130048
    %130 = vst.msk [vmem:[#allocation2] sm:$0xff] %vm129, %v128
    %s131 = scalar_lea.vmem %s0, 4
    %v132 = vld [vmem:[%s131] sm:$0xf]
    %v134 = vsel %vm22, %v132, 0
    %136 = vmatprep.subr.mxu0 0.0
    %137 = vmatpush1.msra.mxu0 %v134
    %138 = vmatprep.subr.mxu0 0.0
    %139 = vmatpush1.msra.mxu0 0.0
    %140 = vmatprep.subr.mxu0 0.0
    %141 = vmatpush1.msra.mxu0 0.0
    %142 = vmatprep.subr.mxu0 0.0
    %143 = vmatpush1.msra.mxu0 0.0
    %144 = vmatprep.subr.mxu0 0.0
    %145 = vmatpush1.msra.mxu0 0.0
    %146 = vmatprep.subr.mxu0 0.0
    %147 = vmatpush1.msra.mxu0 0.0
    %148 = vmatprep.subr.mxu0 0.0
    %149 = vmatpush1.msra.mxu0 0.0
    %150 = vmatprep.subr.mxu0 0.0
    %151 = vmatpush1.msra.mxu0 0.0
    %152 = vmatprep.subr.mxu0 0.0
    %153 = vmatpush1.msra.mxu0 0.0
    %154 = vmatprep.subr.mxu0 0.0
    %155 = vmatpush1.msra.mxu0 0.0
    %156 = vmatprep.subr.mxu0 0.0
    %157 = vmatpush1.msra.mxu0 0.0
    %158 = vmatprep.subr.mxu0 0.0
    %159 = vmatpush1.msra.mxu0 0.0
    %160 = vmatprep.subr.mxu0 0.0
    %161 = vmatpush1.msra.mxu0 0.0
    %162 = vmatprep.subr.mxu0 0.0
    %163 = vmatpush1.msra.mxu0 0.0
    %164 = vmatprep.subr.mxu0 0.0
    %165 = vmatpush1.msra.mxu0 0.0
    %166 = vmatprep.subr.mxu0 0.0
    %167 = vmatpush1.msra.mxu0 0.0
    %168 = vmatprep.subr.mxu0 0.0
    %169 = vmatpush1.msra.mxu0 0.0
    %170 = vmatprep.subr.mxu0 0.0
    %171 = vmatpush1.msra.mxu0 0.0
    %172 = vmatprep.subr.mxu0 0.0
    %173 = vmatpush1.msra.mxu0 0.0
    %174 = vmatprep.subr.mxu0 0.0
    %175 = vmatpush1.msra.mxu0 0.0
    %176 = vmatprep.subr.mxu0 0.0
    %177 = vmatpush1.msra.mxu0 0.0
    %178 = vmatprep.subr.mxu0 0.0
    %179 = vmatpush1.msra.mxu0 0.0
    %180 = vmatprep.subr.mxu0 0.0
    %181 = vmatpush1.msra.mxu0 0.0
    %182 = vmatprep.subr.mxu0 0.0
    %183 = vmatpush1.msra.mxu0 0.0
    %184 = vmatprep.subr.mxu0 0.0
    %185 = vmatpush1.msra.mxu0 0.0
    %186 = vmatprep.subr.mxu0 0.0
    %187 = vmatpush1.msra.mxu0 0.0
    %188 = vmatprep.subr.mxu0 0.0
    %189 = vmatpush1.msra.mxu0 0.0
    %190 = vmatprep.subr.mxu0 0.0
    %191 = vmatpush1.msra.mxu0 0.0
    %192 = vmatprep.subr.mxu0 0.0
    %193 = vmatpush1.msra.mxu0 0.0
    %194 = vmatprep.subr.mxu0 0.0
    %195 = vmatpush1.msra.mxu0 0.0
    %196 = vmatprep.subr.mxu0 0.0
    %197 = vmatpush1.msra.mxu0 0.0
    %198 = vmatprep.subr.mxu0 0.0
    %199 = vmatpush1.msra.mxu0 0.0
    %200 = vmatprep.mubr.f32.mxu0 0.0
    %201 = vmatmul.mubr.f32.gmra.mrb[0].mxu0 %v17
    %v202 = vpop.f32.mrb[0].mxu0
    %v203 = vadd.f32 0.0, %v202
    %v204 = vpop.f32.mrb[0].mxu0
    %205 = vmatprep.mubr.f32.mxu0 0.0
    %206 = vmatmul.mubr.f32.gmra.mrb[0].mxu0 %v20
    %v207 = vpop.f32.mrb[0].mxu0
    %v208 = vadd.f32 0.0, %v207
    %v209 = vpop.f32.mrb[0].mxu0
    %210 = vdwg.mxu0
    %211 = vrot.lane.b32.xlu0 %v208, 16
    %v212 = vpop.permute.xlu0 %211
    %v213 = vsel %vm101, %v212, %v208
    %214 = vrot.lane.b32.xlu0 %v213, 16
    %v215 = vpop.permute.xlu0 %214
    %v216 = vsel %vm101, %v215, %v208
    %218 = vrot.lane.b32.xlu0 %v216, 113
    %v219 = vpop.permute.xlu0 %218
    %v221 = vsel %vm110, %v219, 0.0
    %v222 = vadd.f32 %v203, %v221
    %v223 = vmax.f32 %v222, 0.0
    %224 = vrot.lane.b32.xlu0 %v223, 16
    %v225 = vpop.permute.xlu0 %224
    %v226 = vsel %vm101, %v225, %v223
    %227 = vrot.lane.b32.xlu0 %v226, 16
    %v228 = vpop.permute.xlu0 %227
    %v229 = vsel %vm101, %v228, %v223
    %231 = vrot.lane.b32.xlu0 %v229, 127
    %v232 = vpop.permute.xlu0 %231
    %v234 = vmax.f32 %v223, %v232
    %s235 = scalar_lea.vmem [#allocation2], 8
    %236 = vst.msk [vmem:[%s235] sm:$0xff] %vm129, %v234
    // Predicated region
    $region10: #{tpu_custom_call.1} parent=1 // pred_check
      _
    $region11: #{tpu_custom_call.1} parent=1 // pred_check_branch
      %238 = sbr.rel (0) target = $region13
    $region12: #{tpu_custom_call.1} parent=1 // pred_region
      %s240 = ssub.s32 256, 256
      %241 = vsyncadd [#allocation3], %s240
      %s242 = sshll.u32 [#allocation2], 4
      %s243 = int_to_ptr.vmem [resolvable:$true] %s242
      %248 = dma.vmem_to_hbm [thread:$0]  %s243, 256, %s2, [#allocation3], 128, 128, 8
    $region13: #{tpu_custom_call.1} parent=1 // pred_fallthru
      _
    // Predicated region
    $region14: #{tpu_custom_call.1} parent=1 // pred_check
      _
    $region15: #{tpu_custom_call.1} parent=1 // pred_check_branch
      %250 = sbr.rel (0) target = $region17
    $region16: #{tpu_custom_call.1} parent=1 // pred_region
      %251 = dma.done [#allocation3], 256
    $region17: #{tpu_custom_call.1} parent=1 // pred_fallthru
      _
    %252 = vsyncpa [#allocation3], 1

</llo_original>
